<compile_context>
chip_gen: v7x
topology: tpu7x:2x2x1
jax: 0.10.0
libtpu: 0.0.40
codegen_flags: <defaults>
</compile_context>

<pallas_src>
import jax
import jax.numpy as jnp
from jax.experimental import pallas as pl
from jax.experimental.pallas import tpu as pltpu

NEG_SLOPE = 0.1
NUM_CLASSES = 10
LANE = 128                       # lane-dense padding for the fc2 logits/output
VMEM_LIMIT = 48 * 1024 * 1024    # > v5e/v6e scoped defaults, < v7x 64 MiB physical


def _round_up(x, m):
    return (x + m - 1) // m * m


# ----------------------------- Pallas kernels ------------------------------ #

def _linear_bias_lrelu_kernel(a_ref, w_ref, b_ref, o_ref):
    # a: (TM, K), w: (K, N), b: (1, N) -> o: (TM, N) = leaky_relu(a @ w + b)
    z = jnp.dot(a_ref[...], w_ref[...], preferred_element_type=jnp.float32)
    z = z + b_ref[...]
    o_ref[...] = jnp.where(z >= 0, z, NEG_SLOPE * z)


def _fc_head_kernel(a_ref, w1_ref, b1_ref, w2_ref, b2_ref, y_ref, o_ref):
    # Fused: h = leaky_relu(a @ w1 + b1); logits = h @ w2 + b2 (N padded to 128);
    # o[b, :] = logits[b, y[b]] broadcast across 128 lanes (lane-dense store).
    h = jnp.dot(a_ref[...], w1_ref[...], preferred_element_type=jnp.float32)
    h = h + b1_ref[...]
    h = jnp.where(h >= 0, h, NEG_SLOPE * h)
    logits = jnp.dot(h, w2_ref[...], preferred_element_type=jnp.float32)
    logits = logits + b2_ref[...]
    tb, np_ = logits.shape
    col = jax.lax.broadcasted_iota(jnp.int32, (tb, np_), 1)
    mask = col == y_ref[...]                                   # (TB,1) -> (TB,Np)
    picked = jnp.sum(jnp.where(mask, logits, 0.0), axis=-1, keepdims=True)
    o_ref[...] = jnp.broadcast_to(picked, o_ref.shape)


# ------------------------------ Pallas wrappers ----------------------------- #

def linear_lrelu(a, w, b, *, tm=512):
    """leaky_relu(a @ w + b) with a row-gridded, weight-resident Pallas matmul."""
    M, K = a.shape
    _, N = w.shape
    TM = min(tm, _round_up(M, 8))
    Mp = _round_up(M, TM)
    if Mp != M:
        a = jnp.pad(a, ((0, Mp - M), (0, 0)))
    out = pl.pallas_call(
        _linear_bias_lrelu_kernel,
        out_shape=jax.ShapeDtypeStruct((Mp, N), jnp.float32),
        grid_spec=pltpu.PrefetchScalarGridSpec(
            num_scalar_prefetch=0,
            grid=(Mp // TM,),
            in_specs=[
                pl.BlockSpec((TM, K), lambda i: (i, 0)),   # streamed row tiles
                pl.BlockSpec((K, N), lambda i: (0, 0)),    # weight resident
                pl.BlockSpec((1, N), lambda i: (0, 0)),    # bias resident
            ],
            out_specs=pl.BlockSpec((TM, N), lambda i: (i, 0)),
        ),
        compiler_params=pltpu.CompilerParams(
            dimension_semantics=("parallel",),
            vmem_limit_bytes=VMEM_LIMIT,
        ),
    )(a, w, b.reshape(1, N))
    return out[:M] if Mp != M else out


def fc_head(a, w1, b1, w2p, b2p, y, *, tb=256):
    """Fused fc1 + LeakyReLU + fc2(padded to 128 cols) + gather(1, y) -> (B,)."""
    B, K = a.shape
    N1 = w1.shape[1]
    TB = min(tb, _round_up(B, 8))
    Bp = _round_up(B, TB)
    if Bp != B:
        a = jnp.pad(a, ((0, Bp - B), (0, 0)))
        y = jnp.pad(y, (0, Bp - B))
    y2 = y.astype(jnp.int32).reshape(Bp, 1)
    out = pl.pallas_call(
        _fc_head_kernel,
        out_shape=jax.ShapeDtypeStruct((Bp, LANE), jnp.float32),
        grid_spec=pltpu.PrefetchScalarGridSpec(
            num_scalar_prefetch=0,
            grid=(Bp // TB,),
            in_specs=[
                pl.BlockSpec((TB, K), lambda i: (i, 0)),     # activation tiles
                pl.BlockSpec((K, N1), lambda i: (0, 0)),     # fc1_w resident
                pl.BlockSpec((1, N1), lambda i: (0, 0)),     # fc1_b resident
                pl.BlockSpec((N1, LANE), lambda i: (0, 0)),  # fc2_w (padded) resident
                pl.BlockSpec((1, LANE), lambda i: (0, 0)),   # fc2_b (padded) resident
                pl.BlockSpec((TB, 1), lambda i: (i, 0)),     # labels
            ],
            out_specs=pl.BlockSpec((TB, LANE), lambda i: (i, 0)),
        ),
        compiler_params=pltpu.CompilerParams(
            dimension_semantics=("parallel",),
            vmem_limit_bytes=VMEM_LIMIT,
        ),
    )(a, w1, b1.reshape(1, N1), w2p, b2p.reshape(1, LANE), y2)
    return out[:B, 0]


# ------------------------------- JAX glue ---------------------------------- #

def im2col_nhwc(x, k, s, p):
    """x: (B, H, W, C) NHWC -> patches (B*OH*OW, k*k*C), feature order (kh, kw, c)."""
    B, H, W, C = x.shape
    xp = jnp.pad(x, ((0, 0), (p, p), (p, p), (0, 0)))
    oh = (H + 2 * p - k) // s + 1
    ow = (W + 2 * p - k) // s + 1
    cols = []
    for kh in range(k):
        for kw in range(k):
            cols.append(xp[:, kh:kh + s * oh:s, kw:kw + s * ow:s, :])  # (B,oh,ow,C)
    patches = jnp.concatenate(cols, axis=-1)            # col index = (kh*k+kw)*C + c
    return patches.reshape(B * oh * ow, k * k * C), oh, ow


def init_params(key):
    """PyTorch-layout parameters (OIHW convs, (out,in) linears)."""
    ks = jax.random.split(key, 8)
    scale = 0.05
    return dict(
        conv1_w=scale * jax.random.normal(ks[0], (32, 1, 4, 4), jnp.float32),
        conv1_b=scale * jax.random.normal(ks[1], (32,), jnp.float32),
        conv2_w=scale * jax.random.normal(ks[2], (64, 32, 4, 4), jnp.float32),
        conv2_b=scale * jax.random.normal(ks[3], (64,), jnp.float32),
        fc1_w=scale * jax.random.normal(ks[4], (512, 64 * 7 * 7), jnp.float32),
        fc1_b=scale * jax.random.normal(ks[5], (512,), jnp.float32),
        fc2_w=scale * jax.random.normal(ks[6], (NUM_CLASSES, 512), jnp.float32),
        fc2_b=scale * jax.random.normal(ks[7], (NUM_CLASSES,), jnp.float32),
    )


def prepare_params(p):
    """One-time weight reshapes/permutations (kept out of the forward path)."""
    # Conv weights OIHW -> (kh*kw*cin, cout) matching im2col_nhwc's (kh,kw,c) order.
    w1 = p["conv1_w"].transpose(2, 3, 1, 0).reshape(1 * 4 * 4, 32)
    w2 = p["conv2_w"].transpose(2, 3, 1, 0).reshape(32 * 4 * 4, 64)
    # fc1_w columns follow PyTorch's CHW flatten (Reshape(64*7*7)); permute them
    # once to the NHWC flatten order used by our channels-last activations.
    fc1 = (p["fc1_w"].reshape(512, 64, 7, 7)
           .transpose(0, 2, 3, 1)          # (512, H, W, C)
           .reshape(512, 64 * 7 * 7).T)    # (3136, 512)
    # fc2 padded to a lane-dense 128 columns (extra cols are zero weight/bias).
    fc2 = jnp.zeros((512, LANE), jnp.float32).at[:, :NUM_CLASSES].set(p["fc2_w"].T)
    fc2_b = jnp.zeros((LANE,), jnp.float32).at[:NUM_CLASSES].set(p["fc2_b"])
    return dict(w1=w1, b1=p["conv1_b"], w2=w2, b2=p["conv2_b"],
                fc1_w=fc1, fc1_b=p["fc1_b"], fc2_w=fc2, fc2_b=fc2_b)


def conditional_discriminator_forward(prep, x_nchw, y):
    """x: (B, 1, 28, 28) float32 NCHW, y: (B,) int labels -> (B,) float32."""
    B = x_nchw.shape[0]
    x = x_nchw.transpose(0, 2, 3, 1)                         # tiny one-time NCHW->NHWC

    # Conv1: 1 -> 32, k=4, s=2, p=1 (28x28 -> 14x14), fused bias + LeakyReLU(0.1)
    p1, oh1, ow1 = im2col_nhwc(x, 4, 2, 1)                   # (B*196, 16)
    h1 = linear_lrelu(p1, prep["w1"], prep["b1"])            # (B*196, 32)
    h1 = h1.reshape(B, oh1, ow1, 32)                         # NHWC, no transpose

    # Conv2: 32 -> 64, k=4, s=2, p=1 (14x14 -> 7x7), fused bias + LeakyReLU(0.1)
    p2, oh2, ow2 = im2col_nhwc(h1, 4, 2, 1)                  # (B*49, 512)
    h2 = linear_lrelu(p2, prep["w2"], prep["b2"])            # (B*49, 64)

    # Reshape(64*7*7): NHWC row-major flatten; CHW ordering folded into fc1_w.
    h2 = h2.reshape(B, oh2 * ow2 * 64)                       # (B, 3136)

    # Fused Linear(3136,512) + LeakyReLU + Linear(512,10) + gather(1, y)
    return fc_head(h2, prep["fc1_w"], prep["fc1_b"],
                   prep["fc2_w"], prep["fc2_b"], y)          # (B,)


def reference_forward(params, x, y):
    """Pure-JAX reference mirroring the PyTorch module (original param layout)."""
    dn = ("NCHW", "OIHW", "NCHW")
    z = jax.lax.conv_general_dilated(x, params["conv1_w"], (2, 2),
                                     [(1, 1), (1, 1)], dimension_numbers=dn)
    z = z + params["conv1_b"][None, :, None, None]
    z = jnp.where(z >= 0, z, NEG_SLOPE * z)
    z = jax.lax.conv_general_dilated(z, params["conv2_w"], (2, 2),
                                     [(1, 1), (1, 1)], dimension_numbers=dn)
    z = z + params["conv2_b"][None, :, None, None]
    z = jnp.where(z >= 0, z, NEG_SLOPE * z)
    z = z.reshape(x.shape[0], -1)                            # the Reshape module (CHW order)
    z = z @ params["fc1_w"].T + params["fc1_b"]
    z = jnp.where(z >= 0, z, NEG_SLOPE * z)
    logits = z @ params["fc2_w"].T + params["fc2_b"]
    return jnp.take_along_axis(logits, y[:, None].astype(jnp.int32), axis=1)[:, 0]


if __name__ == "__main__":
    key = jax.random.PRNGKey(0)
    kp, kx, ky = jax.random.split(key, 3)

    params = init_params(kp)
    prep = prepare_params(params)

    B = 2
    x = jax.random.normal(kx, (B, 1, 28, 28), jnp.float32)
    y = jax.random.randint(ky, (B,), 0, NUM_CLASSES, jnp.int32)

    out = jax.block_until_ready(conditional_discriminator_forward(prep, x, y))
    ref = jax.block_until_ready(reference_forward(params, x, y))

    assert out.shape == (B,)
    assert jnp.allclose(out, ref, atol=1e-3, rtol=1e-3), (out, ref)
    print("KERNEL_OK")
</pallas_src>

<mosaic_0001>
module attributes {stable_mosaic.version = 11 : i64} {
  func.func @_linear_bias_lrelu_kernel(%arg0: i32, %arg1: memref<392x16xf32, #tpu.memory_space<vmem>>, %arg2: memref<16x32xf32, #tpu.memory_space<vmem>>, %arg3: memref<1x32xf32, #tpu.memory_space<vmem>>, %arg4: memref<392x32xf32, #tpu.memory_space<vmem>>) attributes {dimension_semantics = [#tpu.dimension_semantics<parallel>], iteration_bounds = array<i64: 1>, scalar_prefetch = 0 : i64, scratch_operands = 0 : i64, tpu.core_type = #tpu.core_type<tc>, window_params = [{transform_indices = @transform_0, window_bounds = array<i64: 392, 16>}, {pipeline_mode = #tpu.pipeline_mode<synchronous>, transform_indices = @transform_1, window_bounds = array<i64: 16, 32>}, {pipeline_mode = #tpu.pipeline_mode<synchronous>, transform_indices = @transform_2, window_bounds = array<i64: 1, 32>}, {transform_indices = @transform_3, window_bounds = array<i64: 392, 32>}]} {
    %c0 = arith.constant 0 : index
    %c0_0 = arith.constant 0 : index
    %0 = vector.load %arg1[%c0, %c0_0] : memref<392x16xf32, #tpu.memory_space<vmem>>, vector<392x16xf32>
    %c0_1 = arith.constant 0 : index
    %c0_2 = arith.constant 0 : index
    %1 = vector.load %arg2[%c0_1, %c0_2] : memref<16x32xf32, #tpu.memory_space<vmem>>, vector<16x32xf32>
    %cst = arith.constant dense<0.000000e+00> : vector<392x32xf32>
    %2 = tpu.matmul %0, %1, %cst {dimension_numbers = #tpu.dot_dimension_numbers<[1], [0], [0], [1], [0, 0, 1, 1], [], []>} : vector<392x16xf32>, vector<16x32xf32>, vector<392x32xf32> -> vector<392x32xf32>
    %c0_3 = arith.constant 0 : index
    %c0_4 = arith.constant 0 : index
    %3 = vector.load %arg3[%c0_3, %c0_4] : memref<1x32xf32, #tpu.memory_space<vmem>>, vector<1x32xf32>
    %4 = vector.broadcast %3 : vector<1x32xf32> to vector<392x32xf32>
    %5 = arith.addf %2, %4 : vector<392x32xf32>
    %cst_5 = arith.constant 0.000000e+00 : f32
    %6 = vector.broadcast %cst_5 : f32 to vector<392x32xf32>
    %7 = arith.cmpf oge, %5, %6 : vector<392x32xf32>
    %cst_6 = arith.constant 1.000000e-01 : f32
    %8 = vector.broadcast %cst_6 : f32 to vector<392x32xf32>
    %9 = arith.mulf %8, %5 : vector<392x32xf32>
    %10 = arith.select %7, %5, %9 : vector<392x32xi1>, vector<392x32xf32>
    %c0_7 = arith.constant 0 : index
    %c0_8 = arith.constant 0 : index
    %11 = vector.load %arg4[%c0_7, %c0_8] : memref<392x32xf32, #tpu.memory_space<vmem>>, vector<392x32xf32>
    tpu.vector_store %arg4[%c0_7, %c0_8], %10 {strides = array<i32>} : memref<392x32xf32, #tpu.memory_space<vmem>>, vector<392x32xf32>,
    return
  }
  func.func @transform_0(%arg0: i32) -> (i32, i32) {
    %c0_i32 = arith.constant 0 : i32
    %c0_i32_0 = arith.constant 0 : i32
    return %arg0, %c0_i32 : i32, i32
  }
  func.func @transform_1(%arg0: i32) -> (i32, i32) {
    %c0_i32 = arith.constant 0 : i32
    %c0_i32_0 = arith.constant 0 : i32
    %c0_i32_1 = arith.constant 0 : i32
    return %c0_i32, %c0_i32_0 : i32, i32
  }
  func.func @transform_2(%arg0: i32) -> (i32, i32) {
    %c0_i32 = arith.constant 0 : i32
    %c0_i32_0 = arith.constant 0 : i32
    %c0_i32_1 = arith.constant 0 : i32
    return %c0_i32, %c0_i32_0 : i32, i32
  }
  func.func @transform_3(%arg0: i32) -> (i32, i32) {
    %c0_i32 = arith.constant 0 : i32
    %c0_i32_0 = arith.constant 0 : i32
    return %arg0, %c0_i32 : i32, i32
  }
}

</mosaic_0001>

<llo_original>
// kernel: tpu_custom_call.1
$region0: #{tpu_custom_call.1}
  #allocation0 [shape = 'u32[]', space=smem, size = 0x4, offset = 0x4, fixed_abs, tag = 'smem constant byte address 0x4 - core index']
  #allocation1 [shape = 'u32[144,128]{1,0:T(1,128)}', space=vmem, size = 0x12000, scoped, tag = 'internal scratch']
  %s0 = inlined_call_operand.vmem [shape: f32[392,16], index: 0, kind: input, shape index: {}]
  %s1 = inlined_call_operand.vmem [shape: f32[16,32], index: 1, kind: input, shape index: {}]
  %s2 = inlined_call_operand.vmem [shape: f32[1,32], index: 2, kind: input, shape index: {}]
  %s3 = inlined_call_operand.vmem [shape: f32[392,32], index: 3, kind: output, shape index: {}]
  %s4 = sld [smem:[#allocation0]]
  $region22: #{tpu_custom_call.1} parent=0
    _
  %s6 = ssub.s32 1, %s4
  %s7 = scalar_select 0, %s6, %s4
  // Predicated region
  $region2: #{tpu_custom_call.1} parent=0 // pred_check
    _
  $region3: #{tpu_custom_call.1} parent=0 // pred_check_branch
    %9 = sbr.rel (0) target = $region5
  $region4: #{tpu_custom_call.1} parent=0 // pred_region
    _
  $region5: #{tpu_custom_call.1} parent=0 // pred_fallthru
    _
  // Predicated region
  $region6: #{tpu_custom_call.1} parent=0 // pred_check
    _
  $region7: #{tpu_custom_call.1} parent=0 // pred_check_branch
    %11 = sbr.rel (0) target = $region9
  $region8: #{tpu_custom_call.1} parent=0 // pred_region
    _
  $region9: #{tpu_custom_call.1} parent=0 // pred_fallthru
    _
  // Predicated region
  $region10: #{tpu_custom_call.1} parent=0 // pred_check
    _
  $region11: #{tpu_custom_call.1} parent=0 // pred_check_branch
    %13 = sbr.rel (0) target = $region13
  $region12: #{tpu_custom_call.1} parent=0 // pred_region
    _
  $region13: #{tpu_custom_call.1} parent=0 // pred_fallthru
    _
  %v14 = vld [vmem:[%s0] sm:$0xff]
  %v15 = vld [vmem:[%s0 + $0x8] sm:$0xff]
  %v16 = vld [vmem:[%s0 + $0x10] sm:$0xff]
  %v17 = vld [vmem:[%s0 + $0x18] sm:$0xff]
  %v18 = vld [vmem:[%s0 + $0x20] sm:$0xff]
  %v19 = vld [vmem:[%s0 + $0x28] sm:$0xff]
  %v20 = vld [vmem:[%s0 + $0x30] sm:$0xff]
  %v21 = vld [vmem:[%s0 + $0x38] sm:$0xff]
  %v22 = vld [vmem:[%s0 + $0x40] sm:$0xff]
  %v23 = vld [vmem:[%s0 + $0x48] sm:$0xff]
  %v24 = vld [vmem:[%s0 + $0x50] sm:$0xff]
  %v25 = vld [vmem:[%s0 + $0x58] sm:$0xff]
  %v26 = vld [vmem:[%s0 + $0x60] sm:$0xff]
  %v27 = vld [vmem:[%s0 + $0x68] sm:$0xff]
  %v28 = vld [vmem:[%s0 + $0x70] sm:$0xff]
  %v29 = vld [vmem:[%s0 + $0x78] sm:$0xff]
  %v30 = vld [vmem:[%s0 + $0x80] sm:$0xff]
  %v31 = vld [vmem:[%s0 + $0x88] sm:$0xff]
  %v32 = vld [vmem:[%s0 + $0x90] sm:$0xff]
  %v33 = vld [vmem:[%s0 + $0x98] sm:$0xff]
  %v34 = vld [vmem:[%s0 + $0xa0] sm:$0xff]
  %v35 = vld [vmem:[%s0 + $0xa8] sm:$0xff]
  %v36 = vld [vmem:[%s0 + $0xb0] sm:$0xff]
  %v37 = vld [vmem:[%s0 + $0xb8] sm:$0xff]
  %v38 = vld [vmem:[%s0 + $0xc0] sm:$0xff]
  %v39 = vld [vmem:[%s0 + $0xc8] sm:$0xff]
  %v40 = vld [vmem:[%s0 + $0xd0] sm:$0xff]
  %v41 = vld [vmem:[%s0 + $0xd8] sm:$0xff]
  %v42 = vld [vmem:[%s0 + $0xe0] sm:$0xff]
  %v43 = vld [vmem:[%s0 + $0xe8] sm:$0xff]
  %v44 = vld [vmem:[%s0 + $0xf0] sm:$0xff]
  %v45 = vld [vmem:[%s0 + $0xf8] sm:$0xff]
  %v46 = vld [vmem:[%s0 + $0x100] sm:$0xff]
  %v47 = vld [vmem:[%s0 + $0x108] sm:$0xff]
  %v48 = vld [vmem:[%s0 + $0x110] sm:$0xff]
  %v49 = vld [vmem:[%s0 + $0x118] sm:$0xff]
  %v50 = vld [vmem:[%s0 + $0x120] sm:$0xff]
  %v51 = vld [vmem:[%s0 + $0x128] sm:$0xff]
  %v52 = vld [vmem:[%s0 + $0x130] sm:$0xff]
  %v53 = vld [vmem:[%s0 + $0x138] sm:$0xff]
  %v54 = vld [vmem:[%s0 + $0x140] sm:$0xff]
  %v55 = vld [vmem:[%s0 + $0x148] sm:$0xff]
  %v56 = vld [vmem:[%s0 + $0x150] sm:$0xff]
  %v57 = vld [vmem:[%s0 + $0x158] sm:$0xff]
  %v58 = vld [vmem:[%s0 + $0x160] sm:$0xff]
  %v59 = vld [vmem:[%s0 + $0x168] sm:$0xff]
  %v60 = vld [vmem:[%s0 + $0x170] sm:$0xff]
  %v61 = vld [vmem:[%s0 + $0x178] sm:$0xff]
  %v62 = vld [vmem:[%s0 + $0x180] sm:$0xff]
  %v63 = vld [vmem:[%s1] sm:$0xff]
  %v64 = vld [vmem:[%s1 + $0x8] sm:$0xff]
  %v65 = vld [vmem:[%s2] sm:$0x1]
  %v67 = vlaneseq
  %v68 = vshrl.u32 %v67, 7
  %v69 = vsub.s32 0, %v68
  %v70 = vrot.slane %v65, %v69
  %vm72 = vcmask 130048
  %v74 = vsel %vm72, %v14, 0
  %v77 = vsel %vm72, %v15, 0
  %v80 = vsel %vm72, %v16, 0
  %v83 = vsel %vm72, %v17, 0
  %v86 = vsel %vm72, %v18, 0
  %v89 = vsel %vm72, %v19, 0
  %v92 = vsel %vm72, %v20, 0
  %v95 = vsel %vm72, %v21, 0
  %v98 = vsel %vm72, %v22, 0
  %v101 = vsel %vm72, %v23, 0
  %v104 = vsel %vm72, %v24, 0
  %v107 = vsel %vm72, %v25, 0
  %v110 = vsel %vm72, %v26, 0
  %v113 = vsel %vm72, %v27, 0
  %v116 = vsel %vm72, %v28, 0
  %v119 = vsel %vm72, %v29, 0
  %v122 = vsel %vm72, %v30, 0
  %v125 = vsel %vm72, %v31, 0
  %v128 = vsel %vm72, %v32, 0
  %v131 = vsel %vm72, %v33, 0
  %v134 = vsel %vm72, %v34, 0
  %v137 = vsel %vm72, %v35, 0
  %v140 = vsel %vm72, %v36, 0
  %v143 = vsel %vm72, %v37, 0
  %v146 = vsel %vm72, %v38, 0
  %v149 = vsel %vm72, %v39, 0
  %v152 = vsel %vm72, %v40, 0
  %v155 = vsel %vm72, %v41, 0
  %v158 = vsel %vm72, %v42, 0
  %v161 = vsel %vm72, %v43, 0
  %v164 = vsel %vm72, %v44, 0
  %v167 = vsel %vm72, %v45, 0
  %v170 = vsel %vm72, %v46, 0
  %v173 = vsel %vm72, %v47, 0
  %v176 = vsel %vm72, %v48, 0
  %v179 = vsel %vm72, %v49, 0
  %v182 = vsel %vm72, %v50, 0
  %v185 = vsel %vm72, %v51, 0
  %v188 = vsel %vm72, %v52, 0
  %v191 = vsel %vm72, %v53, 0
  %v194 = vsel %vm72, %v54, 0
  %v197 = vsel %vm72, %v55, 0
  %v200 = vsel %vm72, %v56, 0
  %v203 = vsel %vm72, %v57, 0
  %v206 = vsel %vm72, %v58, 0
  %v209 = vsel %vm72, %v59, 0
  %v212 = vsel %vm72, %v60, 0
  %v215 = vsel %vm72, %v61, 0
  %v218 = vsel %vm72, %v62, 0
  %220 = vmatprep.subr.mxu0 0.0
  %221 = vmatpush1.msra.mxu0 %v63
  %222 = vmatprep.subr.mxu0 0.0
  %223 = vmatpush1.msra.mxu0 %v64
  %224 = vmatprep.subr.mxu0 0.0
  %225 = vmatpush1.msra.mxu0 0.0
  %226 = vmatprep.subr.mxu0 0.0
  %227 = vmatpush1.msra.mxu0 0.0
  %228 = vmatprep.subr.mxu0 0.0
  %229 = vmatpush1.msra.mxu0 0.0
  %230 = vmatprep.subr.mxu0 0.0
  %231 = vmatpush1.msra.mxu0 0.0
  %232 = vmatprep.subr.mxu0 0.0
  %233 = vmatpush1.msra.mxu0 0.0
  %234 = vmatprep.subr.mxu0 0.0
  %235 = vmatpush1.msra.mxu0 0.0
  %236 = vmatprep.subr.mxu0 0.0
  %237 = vmatpush1.msra.mxu0 0.0
  %238 = vmatprep.subr.mxu0 0.0
  %239 = vmatpush1.msra.mxu0 0.0
  %240 = vmatprep.subr.mxu0 0.0
  %241 = vmatpush1.msra.mxu0 0.0
  %242 = vmatprep.subr.mxu0 0.0
  %243 = vmatpush1.msra.mxu0 0.0
  %244 = vmatprep.subr.mxu0 0.0
  %245 = vmatpush1.msra.mxu0 0.0
  %246 = vmatprep.subr.mxu0 0.0
  %247 = vmatpush1.msra.mxu0 0.0
  %248 = vmatprep.subr.mxu0 0.0
  %249 = vmatpush1.msra.mxu0 0.0
  %250 = vmatprep.subr.mxu0 0.0
  %251 = vmatpush1.msra.mxu0 0.0
  %252 = vmatprep.subr.mxu0 0.0
  %253 = vmatpush1.msra.mxu0 0.0
  %254 = vmatprep.subr.mxu0 0.0
  %255 = vmatpush1.msra.mxu0 0.0
  %256 = vmatprep.subr.mxu0 0.0
  %257 = vmatpush1.msra.mxu0 0.0
  %258 = vmatprep.subr.mxu0 0.0
  %259 = vmatpush1.msra.mxu0 0.0
  %260 = vmatprep.subr.mxu0 0.0
  %261 = vmatpush1.msra.mxu0 0.0
  %262 = vmatprep.subr.mxu0 0.0
  %263 = vmatpush1.msra.mxu0 0.0
  %264 = vmatprep.subr.mxu0 0.0
  %265 = vmatpush1.msra.mxu0 0.0
  %266 = vmatprep.subr.mxu0 0.0
  %267 = vmatpush1.msra.mxu0 0.0
  %268 = vmatprep.subr.mxu0 0.0
  %269 = vmatpush1.msra.mxu0 0.0
  %270 = vmatprep.subr.mxu0 0.0
  %271 = vmatpush1.msra.mxu0 0.0
  %272 = vmatprep.subr.mxu0 0.0
  %273 = vmatpush1.msra.mxu0 0.0
  %274 = vmatprep.subr.mxu0 0.0
  %275 = vmatpush1.msra.mxu0 0.0
  %276 = vmatprep.subr.mxu0 0.0
  %277 = vmatpush1.msra.mxu0 0.0
  %278 = vmatprep.subr.mxu0 0.0
  %279 = vmatpush1.msra.mxu0 0.0
  %280 = vmatprep.subr.mxu0 0.0
  %281 = vmatpush1.msra.mxu0 0.0
  %282 = vmatprep.subr.mxu0 0.0
  %283 = vmatpush1.msra.mxu0 0.0
  %284 = vmatprep.mubr.f32.mxu0 0.0
  %285 = vmatmul.mubr.f32.gmra.mrb[0].mxu0 %v74
  %v286 = vpop.f32.mrb[0].mxu0
  %v287 = vadd.f32 %v70, %v286
  %v288 = vpop.f32.mrb[0].mxu0
  %289 = vmatprep.mubr.f32.mxu0 0.0
  %290 = vmatmul.mubr.f32.gmra.mrb[0].mxu0 %v77
  %v291 = vpop.f32.mrb[0].mxu0
  %v292 = vadd.f32 %v70, %v291
  %v293 = vpop.f32.mrb[0].mxu0
  %294 = vmatprep.mubr.f32.mxu0 0.0
  %295 = vmatmul.mubr.f32.gmra.mrb[0].mxu0 %v80
  %v296 = vpop.f32.mrb[0].mxu0
  %v297 = vadd.f32 %v70, %v296
  %v298 = vpop.f32.mrb[0].mxu0
  %299 = vmatprep.mubr.f32.mxu0 0.0
  %300 = vmatmul.mubr.f32.gmra.mrb[0].mxu0 %v83
  %v301 = vpop.f32.mrb[0].mxu0
  %v302 = vadd.f32 %v70, %v301
  %v303 = vpop.f32.mrb[0].mxu0
  %304 = vmatprep.mubr.f32.mxu0 0.0
  %305 = vmatmul.mubr.f32.gmra.mrb[0].mxu0 %v86
  %v306 = vpop.f32.mrb[0].mxu0
  %v307 = vadd.f32 %v70, %v306
  %v308 = vpop.f32.mrb[0].mxu0
  %309 = vmatprep.mubr.f32.mxu0 0.0
  %310 = vmatmul.mubr.f32.gmra.mrb[0].mxu0 %v89
  %v311 = vpop.f32.mrb[0].mxu0
  %v312 = vadd.f32 %v70, %v311
  %v313 = vpop.f32.mrb[0].mxu0
  %314 = vmatprep.mubr.f32.mxu0 0.0
  %315 = vmatmul.mubr.f32.gmra.mrb[0].mxu0 %v92
  %v316 = vpop.f32.mrb[0].mxu0
  %v317 = vadd.f32 %v70, %v316
  %v318 = vpop.f32.mrb[0].mxu0
  %319 = vmatprep.mubr.f32.mxu0 0.0
  %320 = vmatmul.mubr.f32.gmra.mrb[0].mxu0 %v95
  %v321 = vpop.f32.mrb[0].mxu0
  %v322 = vadd.f32 %v70, %v321
  %v323 = vpop.f32.mrb[0].mxu0
  %324 = vmatprep.mubr.f32.mxu0 0.0
  %325 = vmatmul.mubr.f32.gmra.mrb[0].mxu0 %v98
  %v326 = vpop.f32.mrb[0].mxu0
  %v327 = vadd.f32 %v70, %v326
  %v328 = vpop.f32.mrb[0].mxu0
  %329 = vmatprep.mubr.f32.mxu0 0.0
  %330 = vmatmul.mubr.f32.gmra.mrb[0].mxu0 %v101
  %v331 = vpop.f32.mrb[0].mxu0
  %v332 = vadd.f32 %v70, %v331
  %v333 = vpop.f32.mrb[0].mxu0
  %334 = vmatprep.mubr.f32.mxu0 0.0
  %335 = vmatmul.mubr.f32.gmra.mrb[0].mxu0 %v104
  %v336 = vpop.f32.mrb[0].mxu0
  %v337 = vadd.f32 %v70, %v336
  %v338 = vpop.f32.mrb[0].mxu0
  %339 = vmatprep.mubr.f32.mxu0 0.0
  %340 = vmatmul.mubr.f32.gmra.mrb[0].mxu0 %v107
  %v341 = vpop.f32.mrb[0].mxu0
  %v342 = vadd.f32 %v70, %v341
  %v343 = vpop.f32.mrb[0].mxu0
  %344 = vmatprep.mubr.f32.mxu0 0.0
  %345 = vmatmul.mubr.f32.gmra.mrb[0].mxu0 %v110
  %v346 = vpop.f32.mrb[0].mxu0
  %v347 = vadd.f32 %v70, %v346
  %v348 = vpop.f32.mrb[0].mxu0
  %349 = vmatprep.mubr.f32.mxu0 0.0
  %350 = vmatmul.mubr.f32.gmra.mrb[0].mxu0 %v113
  %v351 = vpop.f32.mrb[0].mxu0
  %v352 = vadd.f32 %v70, %v351
  %v353 = vpop.f32.mrb[0].mxu0
  %354 = vmatprep.mubr.f32.mxu0 0.0
  %355 = vmatmul.mubr.f32.gmra.mrb[0].mxu0 %v116
  %v356 = vpop.f32.mrb[0].mxu0
  %v357 = vadd.f32 %v70, %v356
  %v358 = vpop.f32.mrb[0].mxu0
  %359 = vmatprep.mubr.f32.mxu0 0.0
  %360 = vmatmul.mubr.f32.gmra.mrb[0].mxu0 %v119
  %v361 = vpop.f32.mrb[0].mxu0
  %v362 = vadd.f32 %v70, %v361
  %v363 = vpop.f32.mrb[0].mxu0
  %364 = vmatprep.mubr.f32.mxu0 0.0
  %365 = vmatmul.mubr.f32.gmra.mrb[0].mxu0 %v122
  %v366 = vpop.f32.mrb[0].mxu0
  %v367 = vadd.f32 %v70, %v366
  %v368 = vpop.f32.mrb[0].mxu0
  %369 = vmatprep.mubr.f32.mxu0 0.0
  %370 = vmatmul.mubr.f32.gmra.mrb[0].mxu0 %v125
  %v371 = vpop.f32.mrb[0].mxu0
  %v372 = vadd.f32 %v70, %v371
  %v373 = vpop.f32.mrb[0].mxu0
  %374 = vmatprep.mubr.f32.mxu0 0.0
  %375 = vmatmul.mubr.f32.gmra.mrb[0].mxu0 %v128
  %v376 = vpop.f32.mrb[0].mxu0
  %v377 = vadd.f32 %v70, %v376
  %v378 = vpop.f32.mrb[0].mxu0
  %379 = vmatprep.mubr.f32.mxu0 0.0
  %380 = vmatmul.mubr.f32.gmra.mrb[0].mxu0 %v131
  %v381 = vpop.f32.mrb[0].mxu0
  %v382 = vadd.f32 %v70, %v381
  %v383 = vpop.f32.mrb[0].mxu0
  %384 = vmatprep.mubr.f32.mxu0 0.0
  %385 = vmatmul.mubr.f32.gmra.mrb[0].mxu0 %v134
  %v386 = vpop.f32.mrb[0].mxu0
  %v387 = vadd.f32 %v70, %v386
  %v388 = vpop.f32.mrb[0].mxu0
  %389 = vmatprep.mubr.f32.mxu0 0.0
  %390 = vmatmul.mubr.f32.gmra.mrb[0].mxu0 %v137
  %v391 = vpop.f32.mrb[0].mxu0
  %v392 = vadd.f32 %v70, %v391
  %v393 = vpop.f32.mrb[0].mxu0
  %394 = vmatprep.mubr.f32.mxu0 0.0
  %395 = vmatmul.mubr.f32.gmra.mrb[0].mxu0 %v140
  %v396 = vpop.f32.mrb[0].mxu0
  %v397 = vadd.f32 %v70, %v396
  %v398 = vpop.f32.mrb[0].mxu0
  %399 = vmatprep.mubr.f32.mxu0 0.0
  %400 = vmatmul.mubr.f32.gmra.mrb[0].mxu0 %v143
  %v401 = vpop.f32.mrb[0].mxu0
  %v402 = vadd.f32 %v70, %v401
  %v403 = vpop.f32.mrb[0].mxu0
  %404 = vmatprep.mubr.f32.mxu0 0.0
  %405 = vmatmul.mubr.f32.gmra.mrb[0].mxu0 %v146
  %v406 = vpop.f32.mrb[0].mxu0
  %v407 = vadd.f32 %v70, %v406
  %v408 = vpop.f32.mrb[0].mxu0
  %409 = vmatprep.mubr.f32.mxu0 0.0
  %410 = vmatmul.mubr.f32.gmra.mrb[0].mxu0 %v149
  %v411 = vpop.f32.mrb[0].mxu0
  %v412 = vadd.f32 %v70, %v411
  %v413 = vpop.f32.mrb[0].mxu0
  %414 = vmatprep.mubr.f32.mxu0 0.0
  %415 = vmatmul.mubr.f32.gmra.mrb[0].mxu0 %v152
  %v416 = vpop.f32.mrb[0].mxu0
  %v417 = vadd.f32 %v70, %v416
  %v418 = vpop.f32.mrb[0].mxu0
  %419 = vmatprep.mubr.f32.mxu0 0.0
  %420 = vmatmul.mubr.f32.gmra.mrb[0].mxu0 %v155
  %v421 = vpop.f32.mrb[0].mxu0
  %v422 = vadd.f32 %v70, %v421
  %v423 = vpop.f32.mrb[0].mxu0
  %424 = vmatprep.mubr.f32.mxu0 0.0
  %425 = vmatmul.mubr.f32.gmra.mrb[0].mxu0 %v158
  %v426 = vpop.f32.mrb[0].mxu0
  %v427 = vadd.f32 %v70, %v426
  %v428 = vpop.f32.mrb[0].mxu0
  %429 = vmatprep.mubr.f32.mxu0 0.0
  %430 = vmatmul.mubr.f32.gmra.mrb[0].mxu0 %v161
  %v431 = vpop.f32.mrb[0].mxu0
  %v432 = vadd.f32 %v70, %v431
  %v433 = vpop.f32.mrb[0].mxu0
  %434 = vmatprep.mubr.f32.mxu0 0.0
  %435 = vmatmul.mubr.f32.gmra.mrb[0].mxu0 %v164
  %v436 = vpop.f32.mrb[0].mxu0
  %v437 = vadd.f32 %v70, %v436
  %v438 = vpop.f32.mrb[0].mxu0
  %439 = vmatprep.mubr.f32.mxu0 0.0
  %440 = vmatmul.mubr.f32.gmra.mrb[0].mxu0 %v167
  %v441 = vpop.f32.mrb[0].mxu0
  %v442 = vadd.f32 %v70, %v441
  %v443 = vpop.f32.mrb[0].mxu0
  %444 = vmatprep.mubr.f32.mxu0 0.0
  %445 = vmatmul.mubr.f32.gmra.mrb[0].mxu0 %v170
  %v446 = vpop.f32.mrb[0].mxu0
  %v447 = vadd.f32 %v70, %v446
  %v448 = vpop.f32.mrb[0].mxu0
  %449 = vmatprep.mubr.f32.mxu0 0.0
  %450 = vmatmul.mubr.f32.gmra.mrb[0].mxu0 %v173
  %v451 = vpop.f32.mrb[0].mxu0
  %v452 = vadd.f32 %v70, %v451
  %v453 = vpop.f32.mrb[0].mxu0
  %454 = vmatprep.mubr.f32.mxu0 0.0
  %455 = vmatmul.mubr.f32.gmra.mrb[0].mxu0 %v176
  %v456 = vpop.f32.mrb[0].mxu0
  %v457 = vadd.f32 %v70, %v456
  %v458 = vpop.f32.mrb[0].mxu0
  %459 = vmatprep.mubr.f32.mxu0 0.0
  %460 = vmatmul.mubr.f32.gmra.mrb[0].mxu0 %v179
  %v461 = vpop.f32.mrb[0].mxu0
  %v462 = vadd.f32 %v70, %v461
  %v463 = vpop.f32.mrb[0].mxu0
  %464 = vmatprep.mubr.f32.mxu0 0.0
  %465 = vmatmul.mubr.f32.gmra.mrb[0].mxu0 %v182
  %v466 = vpop.f32.mrb[0].mxu0
  %v467 = vadd.f32 %v70, %v466
  %v468 = vpop.f32.mrb[0].mxu0
  %469 = vmatprep.mubr.f32.mxu0 0.0
  %470 = vmatmul.mubr.f32.gmra.mrb[0].mxu0 %v185
  %v471 = vpop.f32.mrb[0].mxu0
  %v472 = vadd.f32 %v70, %v471
  %v473 = vpop.f32.mrb[0].mxu0
  %474 = vmatprep.mubr.f32.mxu0 0.0
  %475 = vmatmul.mubr.f32.gmra.mrb[0].mxu0 %v188
  %v476 = vpop.f32.mrb[0].mxu0
  %v477 = vadd.f32 %v70, %v476
  %v478 = vpop.f32.mrb[0].mxu0
  %479 = vmatprep.mubr.f32.mxu0 0.0
  %480 = vmatmul.mubr.f32.gmra.mrb[0].mxu0 %v191
  %v481 = vpop.f32.mrb[0].mxu0
  %v482 = vadd.f32 %v70, %v481
  %v483 = vpop.f32.mrb[0].mxu0
  %484 = vmatprep.mubr.f32.mxu0 0.0
  %485 = vmatmul.mubr.f32.gmra.mrb[0].mxu0 %v194
  %v486 = vpop.f32.mrb[0].mxu0
  %v487 = vadd.f32 %v70, %v486
  %v488 = vpop.f32.mrb[0].mxu0
  %489 = vmatprep.mubr.f32.mxu0 0.0
  %490 = vmatmul.mubr.f32.gmra.mrb[0].mxu0 %v197
  %v491 = vpop.f32.mrb[0].mxu0
  %v492 = vadd.f32 %v70, %v491
  %v493 = vpop.f32.mrb[0].mxu0
  %494 = vmatprep.mubr.f32.mxu0 0.0
  %495 = vmatmul.mubr.f32.gmra.mrb[0].mxu0 %v200
  %v496 = vpop.f32.mrb[0].mxu0
  %v497 = vadd.f32 %v70, %v496
  %v498 = vpop.f32.mrb[0].mxu0
  %499 = vmatprep.mubr.f32.mxu0 0.0
  %500 = vmatmul.mubr.f32.gmra.mrb[0].mxu0 %v203
  %v501 = vpop.f32.mrb[0].mxu0
  %v502 = vadd.f32 %v70, %v501
  %v503 = vpop.f32.mrb[0].mxu0
  %504 = vmatprep.mubr.f32.mxu0 0.0
  %505 = vmatmul.mubr.f32.gmra.mrb[0].mxu0 %v206
  %v506 = vpop.f32.mrb[0].mxu0
  %v507 = vadd.f32 %v70, %v506
  %v508 = vpop.f32.mrb[0].mxu0
  %509 = vmatprep.mubr.f32.mxu0 0.0
  %510 = vmatmul.mubr.f32.gmra.mrb[0].mxu0 %v209
  %v511 = vpop.f32.mrb[0].mxu0
  %v512 = vadd.f32 %v70, %v511
  %v513 = vpop.f32.mrb[0].mxu0
  %514 = vmatprep.mubr.f32.mxu0 0.0
  %515 = vmatmul.mubr.f32.gmra.mrb[0].mxu0 %v212
  %v516 = vpop.f32.mrb[0].mxu0
  %v517 = vadd.f32 %v70, %v516
  %v518 = vpop.f32.mrb[0].mxu0
  %519 = vmatprep.mubr.f32.mxu0 0.0
  %520 = vmatmul.mubr.f32.gmra.mrb[0].mxu0 %v215
  %v521 = vpop.f32.mrb[0].mxu0
  %v522 = vadd.f32 %v70, %v521
  %v523 = vpop.f32.mrb[0].mxu0
  %524 = vmatprep.mubr.f32.mxu0 0.0
  %525 = vmatmul.mubr.f32.gmra.mrb[0].mxu0 %v218
  %v526 = vpop.f32.mrb[0].mxu0
  %v527 = vadd.f32 %v70, %v526
  %v528 = vpop.f32.mrb[0].mxu0
  %529 = vdwg.mxu0
  %vm530 = vcmp.ge.f32.partialorder %v287, 0.0
  %vm531 = vcmp.ge.f32.partialorder %v292, 0.0
  %vm532 = vcmp.ge.f32.partialorder %v297, 0.0
  %vm533 = vcmp.ge.f32.partialorder %v302, 0.0
  %vm534 = vcmp.ge.f32.partialorder %v307, 0.0
  %vm535 = vcmp.ge.f32.partialorder %v312, 0.0
  %vm536 = vcmp.ge.f32.partialorder %v317, 0.0
  %vm537 = vcmp.ge.f32.partialorder %v322, 0.0
  %vm538 = vcmp.ge.f32.partialorder %v327, 0.0
  %vm539 = vcmp.ge.f32.partialorder %v332, 0.0
  %vm540 = vcmp.ge.f32.partialorder %v337, 0.0
  %vm541 = vcmp.ge.f32.partialorder %v342, 0.0
  %vm542 = vcmp.ge.f32.partialorder %v347, 0.0
  %vm543 = vcmp.ge.f32.partialorder %v352, 0.0
  %vm544 = vcmp.ge.f32.partialorder %v357, 0.0
  %vm545 = vcmp.ge.f32.partialorder %v362, 0.0
  %vm546 = vcmp.ge.f32.partialorder %v367, 0.0
  %vm547 = vcmp.ge.f32.partialorder %v372, 0.0
  %vm548 = vcmp.ge.f32.partialorder %v377, 0.0
  %vm549 = vcmp.ge.f32.partialorder %v382, 0.0
  %vm550 = vcmp.ge.f32.partialorder %v387, 0.0
  %vm551 = vcmp.ge.f32.partialorder %v392, 0.0
  %vm552 = vcmp.ge.f32.partialorder %v397, 0.0
  %vm553 = vcmp.ge.f32.partialorder %v402, 0.0
  %vm554 = vcmp.ge.f32.partialorder %v407, 0.0
  %vm555 = vcmp.ge.f32.partialorder %v412, 0.0
  %vm556 = vcmp.ge.f32.partialorder %v417, 0.0
  %vm557 = vcmp.ge.f32.partialorder %v422, 0.0
  %vm558 = vcmp.ge.f32.partialorder %v427, 0.0
  %vm559 = vcmp.ge.f32.partialorder %v432, 0.0
  %vm560 = vcmp.ge.f32.partialorder %v437, 0.0
  %vm561 = vcmp.ge.f32.partialorder %v442, 0.0
  %vm562 = vcmp.ge.f32.partialorder %v447, 0.0
  %vm563 = vcmp.ge.f32.partialorder %v452, 0.0
  %vm564 = vcmp.ge.f32.partialorder %v457, 0.0
  %vm565 = vcmp.ge.f32.partialorder %v462, 0.0
  %vm566 = vcmp.ge.f32.partialorder %v467, 0.0
  %vm567 = vcmp.ge.f32.partialorder %v472, 0.0
  %vm568 = vcmp.ge.f32.partialorder %v477, 0.0
  %vm569 = vcmp.ge.f32.partialorder %v482, 0.0
  %vm570 = vcmp.ge.f32.partialorder %v487, 0.0
  %vm571 = vcmp.ge.f32.partialorder %v492, 0.0
  %vm572 = vcmp.ge.f32.partialorder %v497, 0.0
  %vm573 = vcmp.ge.f32.partialorder %v502, 0.0
  %vm574 = vcmp.ge.f32.partialorder %v507, 0.0
  %vm575 = vcmp.ge.f32.partialorder %v512, 0.0
  %vm576 = vcmp.ge.f32.partialorder %v517, 0.0
  %vm577 = vcmp.ge.f32.partialorder %v522, 0.0
  %vm578 = vcmp.ge.f32.partialorder %v527, 0.0
  %v579 = vmul.f32 %v287, 0.1
  %v580 = vmul.f32 %v292, 0.1
  %v581 = vmul.f32 %v297, 0.1
  %v582 = vmul.f32 %v302, 0.1
  %v583 = vmul.f32 %v307, 0.1
  %v584 = vmul.f32 %v312, 0.1
  %v585 = vmul.f32 %v317, 0.1
  %v586 = vmul.f32 %v322, 0.1
  %v587 = vmul.f32 %v327, 0.1
  %v588 = vmul.f32 %v332, 0.1
  %v589 = vmul.f32 %v337, 0.1
  %v590 = vmul.f32 %v342, 0.1
  %v591 = vmul.f32 %v347, 0.1
  %v592 = vmul.f32 %v352, 0.1
  %v593 = vmul.f32 %v357, 0.1
  %v594 = vmul.f32 %v362, 0.1
  %v595 = vmul.f32 %v367, 0.1
  %v596 = vmul.f32 %v372, 0.1
  %v597 = vmul.f32 %v377, 0.1
  %v598 = vmul.f32 %v382, 0.1
  %v599 = vmul.f32 %v387, 0.1
  %v600 = vmul.f32 %v392, 0.1
  %v601 = vmul.f32 %v397, 0.1
  %v602 = vmul.f32 %v402, 0.1
  %v603 = vmul.f32 %v407, 0.1
  %v604 = vmul.f32 %v412, 0.1
  %v605 = vmul.f32 %v417, 0.1
  %v606 = vmul.f32 %v422, 0.1
  %v607 = vmul.f32 %v427, 0.1
  %v608 = vmul.f32 %v432, 0.1
  %v609 = vmul.f32 %v437, 0.1
  %v610 = vmul.f32 %v442, 0.1
  %v611 = vmul.f32 %v447, 0.1
  %v612 = vmul.f32 %v452, 0.1
  %v613 = vmul.f32 %v457, 0.1
  %v614 = vmul.f32 %v462, 0.1
  %v615 = vmul.f32 %v467, 0.1
  %v616 = vmul.f32 %v472, 0.1
  %v617 = vmul.f32 %v477, 0.1
  %v618 = vmul.f32 %v482, 0.1
  %v619 = vmul.f32 %v487, 0.1
  %v620 = vmul.f32 %v492, 0.1
  %v621 = vmul.f32 %v497, 0.1
  %v622 = vmul.f32 %v502, 0.1
  %v623 = vmul.f32 %v507, 0.1
  %v624 = vmul.f32 %v512, 0.1
  %v625 = vmul.f32 %v517, 0.1
  %v626 = vmul.f32 %v522, 0.1
  %v627 = vmul.f32 %v527, 0.1
  %v628 = vsel %vm530, %v287, %v579
  %v629 = vsel %vm531, %v292, %v580
  %v630 = vsel %vm532, %v297, %v581
  %v631 = vsel %vm533, %v302, %v582
  %v632 = vsel %vm534, %v307, %v583
  %v633 = vsel %vm535, %v312, %v584
  %v634 = vsel %vm536, %v317, %v585
  %v635 = vsel %vm537, %v322, %v586
  %v636 = vsel %vm538, %v327, %v587
  %v637 = vsel %vm539, %v332, %v588
  %v638 = vsel %vm540, %v337, %v589
  %v639 = vsel %vm541, %v342, %v590
  %v640 = vsel %vm542, %v347, %v591
  %v641 = vsel %vm543, %v352, %v592
  %v642 = vsel %vm544, %v357, %v593
  %v643 = vsel %vm545, %v362, %v594
  %v644 = vsel %vm546, %v367, %v595
  %v645 = vsel %vm547, %v372, %v596
  %v646 = vsel %vm548, %v377, %v597
  %v647 = vsel %vm549, %v382, %v598
  %v648 = vsel %vm550, %v387, %v599
  %v649 = vsel %vm551, %v392, %v600
  %v650 = vsel %vm552, %v397, %v601
  %v651 = vsel %vm553, %v402, %v602
  %v652 = vsel %vm554, %v407, %v603
  %v653 = vsel %vm555, %v412, %v604
  %v654 = vsel %vm556, %v417, %v605
  %v655 = vsel %vm557, %v422, %v606
  %v656 = vsel %vm558, %v427, %v607
  %v657 = vsel %vm559, %v432, %v608
  %v658 = vsel %vm560, %v437, %v609
  %v659 = vsel %vm561, %v442, %v610
  %v660 = vsel %vm562, %v447, %v611
  %v661 = vsel %vm563, %v452, %v612
  %v662 = vsel %vm564, %v457, %v613
  %v663 = vsel %vm565, %v462, %v614
  %v664 = vsel %vm566, %v467, %v615
  %v665 = vsel %vm567, %v472, %v616
  %v666 = vsel %vm568, %v477, %v617
  %v667 = vsel %vm569, %v482, %v618
  %v668 = vsel %vm570, %v487, %v619
  %v669 = vsel %vm571, %v492, %v620
  %v670 = vsel %vm572, %v497, %v621
  %v671 = vsel %vm573, %v502, %v622
  %v672 = vsel %vm574, %v507, %v623
  %v673 = vsel %vm575, %v512, %v624
  %v674 = vsel %vm576, %v517, %v625
  %v675 = vsel %vm577, %v522, %v626
  %v676 = vsel %vm578, %v527, %v627
  %vm677 = vcmask 261120
  %678 = vst.msk [vmem:[%s3] sm:$0xff] %vm677, %v628
  %679 = vst.msk [vmem:[%s3 + $0x8] sm:$0xff] %vm677, %v629
  %680 = vst.msk [vmem:[%s3 + $0x10] sm:$0xff] %vm677, %v630
  %681 = vst.msk [vmem:[%s3 + $0x18] sm:$0xff] %vm677, %v631
  %682 = vst.msk [vmem:[%s3 + $0x20] sm:$0xff] %vm677, %v632
  %683 = vst.msk [vmem:[%s3 + $0x28] sm:$0xff] %vm677, %v633
  %684 = vst.msk [vmem:[%s3 + $0x30] sm:$0xff] %vm677, %v634
  %685 = vst.msk [vmem:[%s3 + $0x38] sm:$0xff] %vm677, %v635
  %686 = vst.msk [vmem:[%s3 + $0x40] sm:$0xff] %vm677, %v636
  %687 = vst.msk [vmem:[%s3 + $0x48] sm:$0xff] %vm677, %v637
  %688 = vst.msk [vmem:[%s3 + $0x50] sm:$0xff] %vm677, %v638
  %689 = vst.msk [vmem:[%s3 + $0x58] sm:$0xff] %vm677, %v639
  %690 = vst.msk [vmem:[%s3 + $0x60] sm:$0xff] %vm677, %v640
  %691 = vst.msk [vmem:[%s3 + $0x68] sm:$0xff] %vm677, %v641
  %692 = vst.msk [vmem:[%s3 + $0x70] sm:$0xff] %vm677, %v642
  %693 = vst.msk [vmem:[%s3 + $0x78] sm:$0xff] %vm677, %v643
  %694 = vst.msk [vmem:[%s3 + $0x80] sm:$0xff] %vm677, %v644
  %695 = vst.msk [vmem:[%s3 + $0x88] sm:$0xff] %vm677, %v645
  %696 = vst.msk [vmem:[%s3 + $0x90] sm:$0xff] %vm677, %v646
  %697 = vst.msk [vmem:[%s3 + $0x98] sm:$0xff] %vm677, %v647
  %698 = vst.msk [vmem:[%s3 + $0xa0] sm:$0xff] %vm677, %v648
  %699 = vst.msk [vmem:[%s3 + $0xa8] sm:$0xff] %vm677, %v649
  %700 = vst.msk [vmem:[%s3 + $0xb0] sm:$0xff] %vm677, %v650
  %701 = vst.msk [vmem:[%s3 + $0xb8] sm:$0xff] %vm677, %v651
  %702 = vst.msk [vmem:[%s3 + $0xc0] sm:$0xff] %vm677, %v652
  %703 = vst.msk [vmem:[%s3 + $0xc8] sm:$0xff] %vm677, %v653
  %704 = vst.msk [vmem:[%s3 + $0xd0] sm:$0xff] %vm677, %v654
  %705 = vst.msk [vmem:[%s3 + $0xd8] sm:$0xff] %vm677, %v655
  %706 = vst.msk [vmem:[%s3 + $0xe0] sm:$0xff] %vm677, %v656
  %707 = vst.msk [vmem:[%s3 + $0xe8] sm:$0xff] %vm677, %v657
  %708 = vst.msk [vmem:[%s3 + $0xf0] sm:$0xff] %vm677, %v658
  %709 = vst.msk [vmem:[%s3 + $0xf8] sm:$0xff] %vm677, %v659
  %710 = vst.msk [vmem:[%s3 + $0x100] sm:$0xff] %vm677, %v660
  %711 = vst.msk [vmem:[%s3 + $0x108] sm:$0xff] %vm677, %v661
  %712 = vst.msk [vmem:[%s3 + $0x110] sm:$0xff] %vm677, %v662
  %713 = vst.msk [vmem:[%s3 + $0x118] sm:$0xff] %vm677, %v663
  %714 = vst.msk [vmem:[%s3 + $0x120] sm:$0xff] %vm677, %v664
  %715 = vst.msk [vmem:[%s3 + $0x128] sm:$0xff] %vm677, %v665
  %716 = vst.msk [vmem:[%s3 + $0x130] sm:$0xff] %vm677, %v666
  %717 = vst.msk [vmem:[%s3 + $0x138] sm:$0xff] %vm677, %v667
  %718 = vst.msk [vmem:[%s3 + $0x140] sm:$0xff] %vm677, %v668
  %719 = vst.msk [vmem:[%s3 + $0x148] sm:$0xff] %vm677, %v669
  %720 = vst.msk [vmem:[%s3 + $0x150] sm:$0xff] %vm677, %v670
  %721 = vst.msk [vmem:[%s3 + $0x158] sm:$0xff] %vm677, %v671
  %722 = vst.msk [vmem:[%s3 + $0x160] sm:$0xff] %vm677, %v672
  %723 = vst.msk [vmem:[%s3 + $0x168] sm:$0xff] %vm677, %v673
  %724 = vst.msk [vmem:[%s3 + $0x170] sm:$0xff] %vm677, %v674
  %725 = vst.msk [vmem:[%s3 + $0x178] sm:$0xff] %vm677, %v675
  %726 = vst.msk [vmem:[%s3 + $0x180] sm:$0xff] %vm677, %v676
  // Predicated region
  $region14: #{tpu_custom_call.1} parent=0 // pred_check
    _
  $region15: #{tpu_custom_call.1} parent=0 // pred_check_branch
    %728 = sbr.rel (0) target = $region17
  $region16: #{tpu_custom_call.1} parent=0 // pred_region
    _
  $region17: #{tpu_custom_call.1} parent=0 // pred_fallthru
    _
  // Predicated region
  $region18: #{tpu_custom_call.1} parent=0 // pred_check
    _
  $region19: #{tpu_custom_call.1} parent=0 // pred_check_branch
    %730 = sbr.rel (0) target = $region21
  $region20: #{tpu_custom_call.1} parent=0 // pred_region
    _
  $region21: #{tpu_custom_call.1} parent=0 // pred_fallthru
    _

</llo_original>
